<compile_context>
chip_gen: v6e
topology: v6e:2x2x1
jax: 0.10.0
libtpu: 0.0.40
codegen_flags: <defaults>
</compile_context>

<pallas_src>
import jax
import jax.numpy as jnp
from jax.experimental import pallas as pl
from jax.experimental.pallas import tpu as pltpu

_LANES = 128
_MAX_BLOCK_ROWS = 2048  # rows per block; multiple of 32 (bool min tile) and 8 (f32)


# ----------------------------- Pallas kernel ------------------------------- #

def _convert_kernel(x_ref, o_ref):
    # bool -> f32: single VPU convert per vreg (no compare/select constants).
    o_ref[...] = x_ref[...].astype(o_ref.dtype)


# ------------------------------ JAX wrapper -------------------------------- #

def convert_input_pallas(x_bool):
    """Pallas equivalent of BaseInput.convert_input: bool -> float32, same shape."""
    orig_shape = x_bool.shape
    total = x_bool.size

    if total % _LANES == 0:
        # Lane-dense path: pure reshape (no pad, no tail slice).
        rows = total // _LANES
        x2d = x_bool.reshape(rows, _LANES)
        if rows <= _MAX_BLOCK_ROWS:
            # Full-array block (always a legal block shape) -> single step.
            block_rows = rows
        else:
            # Large gridded path: 32-aligned bool blocks, ragged tail handled
            # by Pallas edge-block padding.
            block_rows = _MAX_BLOCK_ROWS
        grid = (pl.cdiv(rows, block_rows),)

        out2d = pl.pallas_call(
            _convert_kernel,
            out_shape=jax.ShapeDtypeStruct((rows, _LANES), jnp.float32),
            grid=grid,
            in_specs=[pl.BlockSpec((block_rows, _LANES), lambda i: (i, 0))],
            out_specs=pl.BlockSpec((block_rows, _LANES), lambda i: (i, 0)),
            compiler_params=pltpu.CompilerParams(
                dimension_semantics=("parallel",)),
        )(x2d)
        return out2d.reshape(orig_shape)

    # Fallback for sizes not divisible by 128: single whole-array block
    # (block shape == full array dims is always legal), still no pad/slice.
    # TODO(synk): very large non-128-divisible tensors would need a tiled path.
    if x_bool.ndim >= 2:
        x2d = x_bool.reshape(-1, orig_shape[-1])
    else:
        x2d = x_bool.reshape(1, -1)
    out2d = pl.pallas_call(
        _convert_kernel,
        out_shape=jax.ShapeDtypeStruct(x2d.shape, jnp.float32),
    )(x2d)
    return out2d.reshape(orig_shape)


# --------------------------- BaseInput equivalent --------------------------- #

class BaseInputPallas:
    """JAX/Pallas port of BaseInput (feed-through input-neuron base class)."""

    def __init__(self, cells_shape, dt):
        self.cells_shape = tuple(cells_shape)
        self.dt = jnp.asarray(dt, dtype=jnp.float32)             # buffer: dt
        self.trace = jnp.zeros(self.cells_shape, jnp.float32)    # buffer: trace
        self.spikes = jnp.zeros(self.cells_shape, jnp.bool_)     # buffer: spikes

    def reset_state(self):
        # Zero-fill via XLA broadcast (full HBM store bandwidth); a gridded
        # Pallas fill only adds launch + per-step overhead for this op.
        self.trace = jnp.zeros(self.cells_shape, jnp.float32)
        self.spikes = jnp.zeros(self.cells_shape, jnp.bool_)

    def init_neuron(self):
        # no_grad() has no JAX analogue needed (arrays are not trainable here).
        self.reset_state()

    def convert_input(self, x):
        return convert_input_pallas(x)

    def forward(self, x):
        # TODO(synk): abstract in the PyTorch source (raises NotImplementedError).
        raise NotImplementedError("Input neurons must implement `forward`")

    def update_trace(self, x):
        # TODO(synk): abstract in the PyTorch source (raises NotImplementedError).
        raise NotImplementedError("Input neurons must implement `update_trace`")


# ---------------------------------- main ----------------------------------- #

if __name__ == "__main__":
    key = jax.random.PRNGKey(0)
    cells_shape = (2, 4, 16, 16)   # (batch, channels, H, W), PyTorch NCHW convention
    dt = 1.0

    neuron = BaseInputPallas(cells_shape, dt)
    neuron.init_neuron()

    # Deterministic boolean spike input (small shape, single-block path).
    x = jax.random.bernoulli(key, p=0.3, shape=cells_shape)
    y = jax.block_until_ready(neuron.convert_input(x))
    trace = jax.block_until_ready(neuron.trace)

    assert y.shape == cells_shape and y.dtype == jnp.float32
    assert bool(jnp.all(y == x.astype(jnp.float32)))
    assert trace.shape == cells_shape and bool(jnp.all(trace == 0.0))
    assert neuron.spikes.dtype == jnp.bool_ and not bool(jnp.any(neuron.spikes))

    # Larger input to exercise the multi-block gridded path with a ragged
    # last block (327680 elems -> 2560 rows -> grid=2, last block partial).
    k2 = jax.random.PRNGKey(1)
    big_shape = (10, 8, 64, 64)
    xb = jax.random.bernoulli(k2, p=0.5, shape=big_shape)
    yb = jax.block_until_ready(convert_input_pallas(xb))
    assert yb.shape == big_shape and yb.dtype == jnp.float32
    assert bool(jnp.all(yb == xb.astype(jnp.float32)))

    print("KERNEL_OK")
</pallas_src>

<mosaic_0001>
module attributes {stable_mosaic.version = 11 : i64} {
  func.func @_convert_kernel(%arg0: i32, %arg1: memref<16x128xi32, #tpu.memory_space<vmem>>, %arg2: memref<16x128xf32, #tpu.memory_space<vmem>>) attributes {dimension_semantics = [#tpu.dimension_semantics<parallel>], iteration_bounds = array<i64: 1>, scalar_prefetch = 0 : i64, scratch_operands = 0 : i64, tpu.core_type = #tpu.core_type<tc>, window_params = [{transform_indices = @transform_0, window_bounds = array<i64: 16, 128>}, {transform_indices = @transform_1, window_bounds = array<i64: 16, 128>}]} {
    %c0 = arith.constant 0 : index
    %c0_0 = arith.constant 0 : index
    %0 = vector.load %arg1[%c0, %c0_0] : memref<16x128xi32, #tpu.memory_space<vmem>>, vector<16x128xi32>
    %cst = arith.constant dense<0> : vector<16x128xi32>
    %1 = arith.cmpi ne, %0, %cst : vector<16x128xi32>
    %2 = arith.extui %1 : vector<16x128xi1> to vector<16x128xi32>
    %3 = arith.sitofp %2 : vector<16x128xi32> to vector<16x128xf32>
    %c0_1 = arith.constant 0 : index
    %c0_2 = arith.constant 0 : index
    %4 = vector.load %arg2[%c0_1, %c0_2] : memref<16x128xf32, #tpu.memory_space<vmem>>, vector<16x128xf32>
    tpu.vector_store %arg2[%c0_1, %c0_2], %3 {strides = array<i32>} : memref<16x128xf32, #tpu.memory_space<vmem>>, vector<16x128xf32>,
    return
  }
  func.func @transform_0(%arg0: i32) -> (i32, i32) {
    %c0_i32 = arith.constant 0 : i32
    %c0_i32_0 = arith.constant 0 : i32
    return %arg0, %c0_i32 : i32, i32
  }
  func.func @transform_1(%arg0: i32) -> (i32, i32) {
    %c0_i32 = arith.constant 0 : i32
    %c0_i32_0 = arith.constant 0 : i32
    return %arg0, %c0_i32 : i32, i32
  }
}

</mosaic_0001>

<llo_original>
// kernel: tpu_custom_call.1
$region0: #{tpu_custom_call.1}
  #allocation0 [shape = 'u32[]', space=smem, size = 0x4, offset = 0x4, fixed_abs, tag = 'smem constant byte address 0x4 - core index']
  #allocation1 [shape = 'u32[144,128]{1,0:T(1,128)}', space=vmem, size = 0x12000, scoped, tag = 'internal scratch']
  %s0 = inlined_call_operand.vmem [shape: s32[16,128], index: 0, kind: input, shape index: {}]
  %s1 = inlined_call_operand.hbm [shape: f32[16,128], index: 1, kind: output, shape index: {}]
  %s2 = sld [smem:[#allocation0]]
  $region14: #{tpu_custom_call.1} parent=0
    _
  %s4 = ssub.s32 1, %s2
  %s5 = scalar_select 0, %s4, %s2
  $region1: #{tpu_custom_call.1} parent=0
    #allocation2 [shape = 'u8[8192]{0}', space=vmem, size = 0x2000, scoped, tag = 'output window, operand 0, single buffered']
    #allocation3 [shape = 's32[1]{0}', space=sflag, size = 0x4, scoped, tag = 'scoped memory for tpu_custom_call.1']
    %6 = vsyncpa [#allocation3], 0
    // Predicated region
    $region2: #{tpu_custom_call.1} parent=1 // pred_check
      _
    $region3: #{tpu_custom_call.1} parent=1 // pred_check_branch
      %8 = sbr.rel (0) target = $region5
    $region4: #{tpu_custom_call.1} parent=1 // pred_region
      _
    $region5: #{tpu_custom_call.1} parent=1 // pred_fallthru
      _
    %v9 = vld [vmem:[%s0] sm:$0xff]
    %v10 = vld [vmem:[%s0 + $0x8] sm:$0xff]
    %vm11 = vcmp.ne.s32.totalorder %v9, 0
    %vm12 = vcmp.ne.s32.totalorder %v10, 0
    %v13 = vsel %vm11, 1, 0
    %v14 = vsel %vm12, 1, 0
    %v15 = vcvt.s32.f32 %v13
    %v16 = vcvt.s32.f32 %v14
    %17 = vst [vmem:[#allocation2] sm:$0xff] %v15
    %18 = vst [vmem:[#allocation2 + $0x8] sm:$0xff] %v16
    // Predicated region
    $region6: #{tpu_custom_call.1} parent=1 // pred_check
      _
    $region7: #{tpu_custom_call.1} parent=1 // pred_check_branch
      %20 = sbr.rel (0) target = $region9
    $region8: #{tpu_custom_call.1} parent=1 // pred_region
      %s22 = ssub.s32 256, 256
      %23 = vsyncadd [#allocation3], %s22
      %s24 = sshll.u32 [#allocation2], 4
      %s25 = int_to_ptr.vmem [resolvable:$true] %s24
      %30 = dma.vmem_to_hbm [thread:$0]  %s25, 256, %s1, [#allocation3], 128, 128, 8
    $region9: #{tpu_custom_call.1} parent=1 // pred_fallthru
      _
    // Predicated region
    $region10: #{tpu_custom_call.1} parent=1 // pred_check
      _
    $region11: #{tpu_custom_call.1} parent=1 // pred_check_branch
      %32 = sbr.rel (0) target = $region13
    $region12: #{tpu_custom_call.1} parent=1 // pred_region
      %33 = dma.done [#allocation3], 256
    $region13: #{tpu_custom_call.1} parent=1 // pred_fallthru
      _
    %34 = vsyncpa [#allocation3], 1

</llo_original>
